<compile_context>
chip_gen: v5e
topology: v5e:2x2
jax: 0.10.0
libtpu: 0.0.40
codegen_flags: <defaults>
</compile_context>

<pallas_src>
import functools

import jax
import jax.numpy as jnp
from jax.experimental import pallas as pl
from jax.experimental.pallas import tpu as pltpu


def _round_up(x, m):
    return (x + m - 1) // m * m


def _vmem_capacity_bytes():
    """Per-TensorCore VMEM capacity; conservative default if the query fails."""
    try:
        cap = getattr(pltpu.get_tpu_info(), "vmem_capacity_bytes", None)
        if cap:
            return int(cap)
    except Exception:
        pass
    return 64 * 1024 * 1024  # v7x per-TC capacity (smallest of the three gens)


def _sublane(itemsize):
    return {4: 8, 2: 16, 1: 32}.get(itemsize, 8)


def _choose_tiles(M, D, Vp, comp_isz, out_isz, budget):
    """Pick (tm, tn, tk) against a double-buffered VMEM footprint budget."""
    sub = _sublane(comp_isz)
    tm = _round_up(min(M, 512), sub)

    def footprint(tm_, tn_, tk_):
        x_tile = 2 * tm_ * tk_ * comp_isz          # double-buffered activations
        w_tile = 2 * tk_ * tn_ * comp_isz          # double-buffered weight
        o_tile = 2 * tm_ * tn_ * out_isz           # double-buffered output
        acc = tm_ * tn_ * 4                        # f32 accumulator scratch
        b_tile = 2 * tn_ * 4                       # bias
        return x_tile + w_tile + o_tile + acc + b_tile

    margin = 2 << 20  # headroom for Mosaic internal scratch

    # 1) Full-K block with the largest lane-dense vocab tile that fits.
    for tn in (2048, 1024, 512, 256, 128):
        tn_c = min(tn, Vp)
        if tn_c % 128:
            continue
        if footprint(tm, tn_c, D) + margin <= budget:
            return tm, tn_c, D

    # 2) Shrink tm (weight stream stays 1x thanks to the vocab-outer grid).
    tm_small = tm
    while tm_small > sub:
        tm_small = max(sub, _round_up(tm_small // 2, sub))
        if footprint(tm_small, min(128, Vp), D) + margin <= budget:
            return tm_small, min(128, Vp), D

    # 3) K-split fallback for very large embed_dim (exact divisors only, so the
    #    reduction never reads out-of-bounds K).
    for tk in (4096, 2048, 1024, 512, 256, 128):
        if tk < D and D % tk == 0 and footprint(tm, min(128, Vp), tk) + margin <= budget:
            return tm, min(128, Vp), tk

    # Last resort: minimal tiles, rely on the explicit vmem_limit_bytes.
    return tm, min(128, Vp), D


def _linear_kernel(x_ref, wt_ref, b_ref, o_ref, acc_ref):
    # x_ref: (tm, tk), wt_ref: (tk, tn) [pre-transposed weight], b_ref: (1, tn),
    # o_ref: (tm, tn), acc_ref: (tm, tn) f32 scratch.
    k = pl.program_id(2)

    @pl.when(k == 0)
    def _():
        acc_ref[...] = jnp.zeros_like(acc_ref)

    acc_ref[...] += jnp.dot(
        x_ref[...], wt_ref[...], preferred_element_type=jnp.float32
    )

    @pl.when(k == pl.num_programs(2) - 1)
    def _():
        o_ref[...] = (acc_ref[...] + b_ref[...].astype(jnp.float32)).astype(o_ref.dtype)


def prepare_linear_params(weight, bias, compute_dtype=None):
    """One-time parameter prep (outside the per-call path).

    weight: (V, D) PyTorch nn.Linear layout -> returned as (D, Vp) transposed and
    padded to a multiple of 128 so every vocab tile is lane-dense.  bias -> (1, Vp).
    """
    V, D = weight.shape
    Vp = _round_up(V, 128)
    w_t = weight.T  # (D, V)
    if Vp != V:
        w_t = jnp.pad(w_t, ((0, 0), (0, Vp - V)))
        bias = jnp.pad(bias, (0, Vp - V))
    if compute_dtype is not None:
        w_t = w_t.astype(compute_dtype)
    b2d = bias.astype(jnp.float32).reshape(1, Vp)
    return w_t, b2d, V


@functools.partial(
    jax.jit, static_argnames=("vocab_size", "compute_dtype", "tm", "tn", "tk")
)
def linear_pallas(x, w_t, b2d, *, vocab_size, compute_dtype=None, tm=None, tn=None, tk=None):
    """Computes x @ W^T + b with W pre-transposed/padded by prepare_linear_params.

    x:   (..., D)
    w_t: (D, Vp)  (already transposed + lane-padded, static per model)
    b2d: (1, Vp)  f32
    """
    orig_shape = x.shape
    D = orig_shape[-1]
    Vp = w_t.shape[1]
    out_dtype = x.dtype

    if compute_dtype is not None:
        x = x.astype(compute_dtype)
        if w_t.dtype != compute_dtype:
            w_t = w_t.astype(compute_dtype)

    x2d = x.reshape(-1, D)
    M = x2d.shape[0]

    comp_isz = jnp.dtype(x2d.dtype).itemsize
    out_isz = jnp.dtype(out_dtype).itemsize

    cap = _vmem_capacity_bytes()
    budget = min(int(cap * 0.5), 96 << 20)          # ~32 MiB on v7x, ~64 MiB on v5e/v6e
    vmem_limit = min(int(cap * 0.75), 112 << 20)    # explicit scoped limit > default

    a_tm, a_tn, a_tk = _choose_tiles(M, D, Vp, comp_isz, out_isz, budget)
    tm = a_tm if tm is None else tm
    tn = a_tn if tn is None else tn
    tk = a_tk if tk is None else tk

    # Vocab (j) outer -> weight streamed from HBM exactly once and megacore splits
    # the weight stream; M (i) middle; K (k) innermost reduction.
    grid = (pl.cdiv(Vp, tn), pl.cdiv(M, tm), pl.cdiv(D, tk))

    out = pl.pallas_call(
        _linear_kernel,
        out_shape=jax.ShapeDtypeStruct((M, Vp), out_dtype),
        grid_spec=pltpu.PrefetchScalarGridSpec(
            num_scalar_prefetch=0,
            grid=grid,
            in_specs=[
                pl.BlockSpec((tm, tk), lambda j, i, k: (i, k)),   # activations
                pl.BlockSpec((tk, tn), lambda j, i, k: (k, j)),   # weight (D, Vp)
                pl.BlockSpec((1, tn), lambda j, i, k: (0, j)),    # bias
            ],
            out_specs=pl.BlockSpec((tm, tn), lambda j, i, k: (i, j)),
            scratch_shapes=[pltpu.VMEM((tm, tn), jnp.float32)],
        ),
        compiler_params=pltpu.CompilerParams(
            dimension_semantics=("parallel", "parallel", "arbitrary"),
            vmem_limit_bytes=int(vmem_limit),
        ),
    )(x2d, w_t, b2d)

    if Vp != vocab_size:
        # TODO(synk): for long prefill, keep the padded (M, Vp) logits flowing to the
        # consumer (mask the tail) instead of paying this extra HBM copy.
        out = out[:, :vocab_size]
    return out.reshape(*orig_shape[:-1], vocab_size)


def init_linear_params(key, vocab_size, embed_dim, dtype=jnp.float32):
    """Deterministic init matching nn.Linear's default (uniform +/- 1/sqrt(fan_in))."""
    k_w, k_b = jax.random.split(key)
    bound = 1.0 / (embed_dim ** 0.5)
    weight = jax.random.uniform(
        k_w, (vocab_size, embed_dim), dtype=dtype, minval=-bound, maxval=bound
    )
    bias = jax.random.uniform(
        k_b, (vocab_size,), dtype=dtype, minval=-bound, maxval=bound
    )
    return weight, bias


if __name__ == "__main__":
    batch, seq, embed_dim, vocab_size = 2, 8, 32, 128

    key = jax.random.PRNGKey(0)
    k_x, k_p = jax.random.split(key)

    x = jax.random.normal(k_x, (batch, seq, embed_dim), dtype=jnp.float32)
    weight, bias = init_linear_params(k_p, vocab_size, embed_dim)

    # One-time parameter prep (transpose + lane padding) outside the forward path.
    w_t, b2d, V = prepare_linear_params(weight, bias)

    out = linear_pallas(x, w_t, b2d, vocab_size=V)
    out = jax.block_until_ready(out)

    # Sanity check against plain JAX reference of the PyTorch module semantics.
    ref = x @ weight.T + bias
    assert out.shape == (batch, seq, vocab_size)
    assert jnp.allclose(out, ref, atol=1e-5, rtol=1e-5)

    print("KERNEL_OK")
</pallas_src>

<mosaic_0001>
module attributes {stable_mosaic.version = 11 : i64} {
  func.func @_linear_kernel(%arg0: i32, %arg1: i32, %arg2: i32, %arg3: memref<16x32xf32, #tpu.memory_space<vmem>>, %arg4: memref<32x128xf32, #tpu.memory_space<vmem>>, %arg5: memref<1x128xf32, #tpu.memory_space<vmem>>, %arg6: memref<16x128xf32, #tpu.memory_space<vmem>>, %arg7: memref<16x128xf32, #tpu.memory_space<vmem>>) attributes {dimension_semantics = [#tpu.dimension_semantics<parallel>, #tpu.dimension_semantics<parallel>, #tpu.dimension_semantics<arbitrary>], iteration_bounds = array<i64: 1, 1, 1>, scalar_prefetch = 0 : i64, scratch_operands = 1 : i64, tpu.core_type = #tpu.core_type<tc>, window_params = [{transform_indices = @transform_0, window_bounds = array<i64: 16, 32>}, {transform_indices = @transform_1, window_bounds = array<i64: 32, 128>}, {transform_indices = @transform_2, window_bounds = array<i64: 1, 128>}, {transform_indices = @transform_3, window_bounds = array<i64: 16, 128>}]} {
    %c0_i32 = arith.constant 0 : i32
    %0 = arith.cmpi eq, %arg2, %c0_i32 : i32
    %1 = arith.extui %0 : i1 to i32
    %c0_i32_0 = arith.constant 0 : i32
    %2 = arith.cmpi ne, %1, %c0_i32_0 : i32
    scf.if %2 {
      %cst_10 = arith.constant 0.000000e+00 : f32
      %12 = vector.broadcast %cst_10 : f32 to vector<16x128xf32>
      %c0_11 = arith.constant 0 : index
      %c0_12 = arith.constant 0 : index
      %13 = vector.load %arg7[%c0_11, %c0_12] : memref<16x128xf32, #tpu.memory_space<vmem>>, vector<16x128xf32>
      tpu.vector_store %arg7[%c0_11, %c0_12], %12 {strides = array<i32>} : memref<16x128xf32, #tpu.memory_space<vmem>>, vector<16x128xf32>,
    } else {
    }
    %c0 = arith.constant 0 : index
    %c0_1 = arith.constant 0 : index
    %3 = vector.load %arg7[%c0, %c0_1] : memref<16x128xf32, #tpu.memory_space<vmem>>, vector<16x128xf32>
    %c0_2 = arith.constant 0 : index
    %c0_3 = arith.constant 0 : index
    %4 = vector.load %arg3[%c0_2, %c0_3] : memref<16x32xf32, #tpu.memory_space<vmem>>, vector<16x32xf32>
    %c0_4 = arith.constant 0 : index
    %c0_5 = arith.constant 0 : index
    %5 = vector.load %arg4[%c0_4, %c0_5] : memref<32x128xf32, #tpu.memory_space<vmem>>, vector<32x128xf32>
    %cst = arith.constant dense<0.000000e+00> : vector<16x128xf32>
    %6 = tpu.matmul %4, %5, %cst {dimension_numbers = #tpu.dot_dimension_numbers<[1], [0], [0], [1], [0, 0, 1, 1], [], []>} : vector<16x32xf32>, vector<32x128xf32>, vector<16x128xf32> -> vector<16x128xf32>
    %7 = arith.addf %3, %6 : vector<16x128xf32>
    %c0_6 = arith.constant 0 : index
    %c0_7 = arith.constant 0 : index
    %8 = vector.load %arg7[%c0_6, %c0_7] : memref<16x128xf32, #tpu.memory_space<vmem>>, vector<16x128xf32>
    tpu.vector_store %arg7[%c0_6, %c0_7], %7 {strides = array<i32>} : memref<16x128xf32, #tpu.memory_space<vmem>>, vector<16x128xf32>,
    %c0_i32_8 = arith.constant 0 : i32
    %9 = arith.cmpi eq, %arg2, %c0_i32_8 : i32
    %10 = arith.extui %9 : i1 to i32
    %c0_i32_9 = arith.constant 0 : i32
    %11 = arith.cmpi ne, %10, %c0_i32_9 : i32
    scf.if %11 {
      %c0_10 = arith.constant 0 : index
      %c0_11 = arith.constant 0 : index
      %12 = vector.load %arg7[%c0_10, %c0_11] : memref<16x128xf32, #tpu.memory_space<vmem>>, vector<16x128xf32>
      %c0_12 = arith.constant 0 : index
      %c0_13 = arith.constant 0 : index
      %13 = vector.load %arg5[%c0_12, %c0_13] : memref<1x128xf32, #tpu.memory_space<vmem>>, vector<1x128xf32>
      %14 = vector.broadcast %13 : vector<1x128xf32> to vector<16x128xf32>
      %15 = arith.addf %12, %14 : vector<16x128xf32>
      %c0_14 = arith.constant 0 : index
      %c0_15 = arith.constant 0 : index
      %16 = vector.load %arg6[%c0_14, %c0_15] : memref<16x128xf32, #tpu.memory_space<vmem>>, vector<16x128xf32>
      tpu.vector_store %arg6[%c0_14, %c0_15], %15 {strides = array<i32>} : memref<16x128xf32, #tpu.memory_space<vmem>>, vector<16x128xf32>,
    } else {
    }
    return
  }
  func.func @transform_0(%arg0: i32, %arg1: i32, %arg2: i32) -> (i32, i32) {
    %c0_i32 = arith.constant 0 : i32
    return %arg1, %arg2 : i32, i32
  }
  func.func @transform_1(%arg0: i32, %arg1: i32, %arg2: i32) -> (i32, i32) {
    %c0_i32 = arith.constant 0 : i32
    return %arg2, %arg0 : i32, i32
  }
  func.func @transform_2(%arg0: i32, %arg1: i32, %arg2: i32) -> (i32, i32) {
    %c0_i32 = arith.constant 0 : i32
    %c0_i32_0 = arith.constant 0 : i32
    return %c0_i32, %arg0 : i32, i32
  }
  func.func @transform_3(%arg0: i32, %arg1: i32, %arg2: i32) -> (i32, i32) {
    %c0_i32 = arith.constant 0 : i32
    return %arg1, %arg0 : i32, i32
  }
}

</mosaic_0001>

<llo_original>
// kernel: linear_pallas.1
$region0: #{linear_pallas.1}
  #allocation0 [shape = 'u32[]', space=smem, size = 0x4, offset = 0x4, fixed_abs, tag = 'smem constant byte address 0x4 - core index']
  #allocation1 [shape = 'u32[72,128]{1,0:T(1,128)}', space=vmem, size = 0x9000, scoped, tag = 'internal scratch']
  #allocation2 [shape = 'f32[16,128]{1,0:T(8,128)}', space=vmem, size = 0x2000, scoped, tag = 'scratch operand']
  %s0 = inlined_call_operand.hbm [shape: f32[16,32], index: 0, kind: input, shape index: {}]
  %s1 = inlined_call_operand.hbm [shape: f32[32,128], index: 1, kind: input, shape index: {}]
  %s2 = inlined_call_operand.vmem [shape: f32[1,128], index: 2, kind: input, shape index: {}]
  %s3 = inlined_call_operand.hbm [shape: f32[16,128], index: 3, kind: output, shape index: {}]
  %s4 = sld [smem:[#allocation0]]
  $region38: #{linear_pallas.1} parent=0
    _
  %s6 = ssub.s32 1, %s4
  %s7 = scalar_select 0, %s6, %s4
  $region1: #{linear_pallas.1} parent=0
    #allocation3 [shape = 'u8[8192]{0}', space=vmem, size = 0x2000, scoped, tag = 'input window, operand 0, single buffered']
    #allocation4 [shape = 's32[1]{0}', space=sflag, size = 0x4, scoped, tag = 'scoped memory for linear_pallas.1']
    #allocation5 [shape = 's32[1]{0}', space=sflag, size = 0x4, scoped, tag = 'scoped memory for linear_pallas.1']
    #allocation6 [shape = 'u8[16384]{0}', space=vmem, size = 0x4000, scoped, tag = 'input window, operand 1, single buffered']
    #allocation7 [shape = 's32[1]{0}', space=sflag, size = 0x4, scoped, tag = 'scoped memory for linear_pallas.1']
    #allocation8 [shape = 'u8[8192]{0}', space=vmem, size = 0x2000, scoped, tag = 'output window, operand 0, single buffered']
    %8 = vsyncpa [#allocation4], 0
    %9 = vsyncpa [#allocation7], 0
    %10 = vsyncpa [#allocation5], 0
    // Predicated region
    $region2: #{linear_pallas.1} parent=1 // pred_check
      _
    $region3: #{linear_pallas.1} parent=1 // pred_check_branch
      %12 = sbr.rel (0) target = $region5
    $region4: #{linear_pallas.1} parent=1 // pred_region
      %14 = vsyncadd [#allocation4], 0
      %s15 = sshll.u32 %s0, 4
      %s16 = int_to_ptr.hbm [resolvable:$true] %s15
      %s17 = sshll.u32 [#allocation3], 4
      %s18 = int_to_ptr.vmem [resolvable:$true] %s17
      %23 = dma.hbm_to_vmem [thread:$0]  %s16, 256, %s18, [#allocation4], 128, 128, 8
    $region5: #{linear_pallas.1} parent=1 // pred_fallthru
      _
    // Predicated region
    $region6: #{linear_pallas.1} parent=1 // pred_check
      _
    $region7: #{linear_pallas.1} parent=1 // pred_check_branch
      %25 = sbr.rel (0) target = $region9
    $region8: #{linear_pallas.1} parent=1 // pred_region
      %27 = vsyncadd [#allocation7], 0
      %s28 = sshll.u32 %s1, 4
      %s29 = int_to_ptr.hbm [resolvable:$true] %s28
      %s30 = sshll.u32 [#allocation6], 4
      %s31 = int_to_ptr.vmem [resolvable:$true] %s30
      %36 = dma.hbm_to_vmem [thread:$0]  %s29, 512, %s31, [#allocation7], 128, 128, 8
    $region9: #{linear_pallas.1} parent=1 // pred_fallthru
      _
    // Predicated region
    $region10: #{linear_pallas.1} parent=1 // pred_check
      _
    $region11: #{linear_pallas.1} parent=1 // pred_check_branch
      %38 = sbr.rel (0) target = $region13
    $region12: #{linear_pallas.1} parent=1 // pred_region
      _
    $region13: #{linear_pallas.1} parent=1 // pred_fallthru
      _
    // Predicated region
    $region14: #{linear_pallas.1} parent=1 // pred_check
      _
    $region15: #{linear_pallas.1} parent=1 // pred_check_branch
      %40 = sbr.rel (0) target = $region17
    $region16: #{linear_pallas.1} parent=1 // pred_region
      %42 = dma.done [#allocation4], 256
    $region17: #{linear_pallas.1} parent=1 // pred_fallthru
      _
    // Predicated region
    $region18: #{linear_pallas.1} parent=1 // pred_check
      _
    $region19: #{linear_pallas.1} parent=1 // pred_check_branch
      %44 = sbr.rel (0) target = $region21
    $region20: #{linear_pallas.1} parent=1 // pred_region
      %46 = dma.done [#allocation7], 512
    $region21: #{linear_pallas.1} parent=1 // pred_fallthru
      _
    %p47 = scmp.eq.s32.totalorder 0, 0
    // Predicated region
    $region22: #{linear_pallas.1} parent=1 // pred_check
      %p48 = pneg %p47
    $region23: #{linear_pallas.1} parent=1 // pred_check_branch
      %50 = sbr.rel (%p48) target = $region25
    $region24: #{linear_pallas.1} parent=1 // pred_region
      %51 = vst [vmem:[#allocation2] sm:$0xff] 0.0
      %52 = vst [vmem:[#allocation2 + $0x8] sm:$0xff] 0.0
    $region25: #{linear_pallas.1} parent=1 // pred_fallthru
      _
    %v53 = vld [vmem:[#allocation2] sm:$0xff]
    %v54 = vld [vmem:[#allocation2 + $0x8] sm:$0xff]
    %v55 = vld [vmem:[#allocation3] sm:$0xff]
    %v56 = vld [vmem:[#allocation3 + $0x8] sm:$0xff]
    %v57 = vld [vmem:[#allocation6] sm:$0xff]
    %v58 = vld [vmem:[#allocation6 + $0x8] sm:$0xff]
    %v59 = vld [vmem:[#allocation6 + $0x10] sm:$0xff]
    %v60 = vld [vmem:[#allocation6 + $0x18] sm:$0xff]
    %vm61 = vcmask 261120
    %v63 = vsel %vm61, %v55, 0
    %v66 = vsel %vm61, %v56, 0
    %68 = vmatpush.msra.mxu0 0.0
    %69 = vmatpush.msra.mxu0 0.0
    %70 = vmatpush.msra.mxu0 0.0
    %71 = vmatpush.msra.mxu0 0.0
    %72 = vmatpush.msra.mxu0 0.0
    %73 = vmatpush.msra.mxu0 0.0
    %74 = vmatpush.msra.mxu0 0.0
    %75 = vmatpush.msra.mxu0 0.0
    %76 = vmatpush.msra.mxu0 0.0
    %77 = vmatpush.msra.mxu0 0.0
    %78 = vmatpush.msra.mxu0 0.0
    %79 = vmatpush.msra.mxu0 0.0
    %80 = vmatpush.msra.mxu0 %v60
    %81 = vmatpush.msra.mxu0 %v59
    %82 = vmatpush.msra.mxu0 %v58
    %83 = vmatpush.msra.mxu0 %v57
    %84 = vmatmul.f32.gmra.mxu0 %v63
    %v85 = vpop.f32.mrf.mxu0
    %v86 = vadd.f32 0.0, %v85
    %87 = vmatmul.f32.gmra.mxu0 %v66
    %v88 = vpop.f32.mrf.mxu0
    %v89 = vadd.f32 0.0, %v88
    %90 = vdwg.mxu0
    %v91 = vadd.f32 %v53, %v86
    %v92 = vadd.f32 %v54, %v89
    %93 = vst [vmem:[#allocation2] sm:$0xff] %v91
    %94 = vst [vmem:[#allocation2 + $0x8] sm:$0xff] %v92
    // Predicated region
    $region26: #{linear_pallas.1} parent=1 // pred_check
      %p95 = pneg %p47
    $region27: #{linear_pallas.1} parent=1 // pred_check_branch
      %97 = sbr.rel (%p95) target = $region29
    $region28: #{linear_pallas.1} parent=1 // pred_region
      %v98 = vld [vmem:[#allocation2] sm:$0xff]
      %v99 = vld [vmem:[#allocation2 + $0x8] sm:$0xff]
      %v100 = vld [vmem:[%s2] sm:$0x1]
      %v102 = vperm.slane %v100, 0
      %v104 = vadd.f32 %v98, %v102
      %v105 = vadd.f32 %v99, %v102
      %106 = vst [vmem:[#allocation8] sm:$0xff] %v104
      %107 = vst [vmem:[#allocation8 + $0x8] sm:$0xff] %v105
    $region29: #{linear_pallas.1} parent=1 // pred_fallthru
      _
    // Predicated region
    $region30: #{linear_pallas.1} parent=1 // pred_check
      _
    $region31: #{linear_pallas.1} parent=1 // pred_check_branch
      %109 = sbr.rel (0) target = $region33
    $region32: #{linear_pallas.1} parent=1 // pred_region
      %111 = vsyncadd [#allocation5], 0
      %s112 = sshll.u32 [#allocation8], 4
      %s113 = int_to_ptr.vmem [resolvable:$true] %s112
      %s114 = sshll.u32 %s3, 4
      %s115 = int_to_ptr.hbm [resolvable:$true] %s114
      %120 = dma.vmem_to_hbm [thread:$0]  %s113, 256, %s115, [#allocation5], 128, 128, 8
    $region33: #{linear_pallas.1} parent=1 // pred_fallthru
      _
    // Predicated region
    $region34: #{linear_pallas.1} parent=1 // pred_check
      _
    $region35: #{linear_pallas.1} parent=1 // pred_check_branch
      %122 = sbr.rel (0) target = $region37
    $region36: #{linear_pallas.1} parent=1 // pred_region
      %124 = dma.done [#allocation5], 256
    $region37: #{linear_pallas.1} parent=1 // pred_fallthru
      _
    %125 = vsyncpa [#allocation4], 1
    %126 = vsyncpa [#allocation7], 1
    %127 = vsyncpa [#allocation5], 1

</llo_original>
